<compile_context>
chip_gen: v5e
topology: v5e:2x2
jax: 0.10.0
libtpu: 0.0.40
codegen_flags: <defaults>
</compile_context>

<pallas_src>
import jax
import jax.numpy as jnp
from jax.experimental import pallas as pl
from jax.experimental.pallas import tpu as pltpu


def _copy_kernel(x_ref, o_ref):
    # Straight VMEM copy of the current tile.
    o_ref[...] = x_ref[...]


_LANE = 128
_MAX_COLS = 2048                       # lane-dense slab width (multiple of 128)
_TARGET_TILE_BYTES = 8 * 1024 * 1024   # ~8 MiB per tile (past the 85% knee)
_VMEM_LIMIT_BYTES = 48 * 1024 * 1024   # 2 bufs x (in+out) x 8 MiB = 32 MiB + headroom


def _lane_dense_cols(total: int):
    """Largest power-of-two multiple of 128 (<= _MAX_COLS) dividing total."""
    cols = _MAX_COLS
    while cols >= _LANE:
        if total % cols == 0:
            return cols
        cols //= 2
    return None


def _identity_impl(x: jax.Array) -> jax.Array:
    orig_shape = x.shape
    total = int(x.size) if x.ndim > 0 else 1

    if total == 0:
        return x

    cols = _lane_dense_cols(total)
    if cols is None:
        # Not reshapeable to a lane-dense slab: Identity is a semantic no-op,
        # so return the input directly (zero HBM traffic, no VMEM-OOM risk).
        return x

    rows = total // cols
    itemsize = jnp.dtype(x.dtype).itemsize
    x2 = x.reshape(rows, cols)

    # Dtype-aware sublane multiple (f32: 8, bf16: 16, int8/fp8: 32).
    sub = max(8, 32 // itemsize)
    # Row cap that keeps the per-step tile around _TARGET_TILE_BYTES.
    tm_cap = max(sub, (_TARGET_TILE_BYTES // (cols * itemsize)) // sub * sub)

    if rows > tm_cap:
        tm = tm_cap
    elif rows >= 2 * sub:
        # Fits in one tile: still split into >=2 grid steps so both v7x
        # TensorCores get work (cdiv(rows, 2) rounded up to sublane multiple).
        tm = max(sub, -(-((rows + 1) // 2) // sub) * sub)
    else:
        tm = rows  # full-extent block (exempt from the (8,128) rule)

    grid = (pl.cdiv(rows, tm),)

    out2 = pl.pallas_call(
        _copy_kernel,
        out_shape=jax.ShapeDtypeStruct((rows, cols), x.dtype),
        grid=grid,
        # Block spans the full `cols` extent -> contiguous HBM DMA bursts.
        in_specs=[pl.BlockSpec((tm, cols), lambda i: (i, 0))],
        out_specs=pl.BlockSpec((tm, cols), lambda i: (i, 0)),
        input_output_aliases={0: 0},  # alias input HBM buffer (needs donation)
        compiler_params=pltpu.CompilerParams(
            dimension_semantics=("parallel",),
            vmem_limit_bytes=_VMEM_LIMIT_BYTES,
        ),
        cost_estimate=pl.CostEstimate(
            flops=0,
            transcendentals=0,
            bytes_accessed=2 * total * itemsize,
        ),
    )(x2)

    return out2.reshape(orig_shape)


# donate_argnums=0 makes input_output_aliases actually bite: the caller's HBM
# buffer is reused for the output instead of XLA inserting a defensive copy.
identity = jax.jit(_identity_impl, donate_argnums=0)


if __name__ == "__main__":
    key = jax.random.PRNGKey(0)
    shape = (2, 4, 16, 16)  # small NCHW-like input consistent with forward(x)
    x = jax.random.normal(key, shape, dtype=jnp.float32)
    # x is donated to the jit call below, so keep an identical reference copy
    # (same key, same shape) for the correctness check.
    x_ref = jax.random.normal(key, shape, dtype=jnp.float32)

    y = identity(x)
    y = jax.block_until_ready(y)

    assert y.shape == x_ref.shape, (y.shape, x_ref.shape)
    assert y.dtype == x_ref.dtype, (y.dtype, x_ref.dtype)
    assert bool(jnp.all(y == x_ref)), "identity kernel did not reproduce input"

    print("KERNEL_OK")
</pallas_src>

<mosaic_0001>
module attributes {stable_mosaic.version = 11 : i64} {
  func.func @_copy_kernel(%arg0: i32, %arg1: memref<1x2048xf32, #tpu.memory_space<vmem>>, %arg2: memref<1x2048xf32, #tpu.memory_space<vmem>>) attributes {dimension_semantics = [#tpu.dimension_semantics<parallel>], iteration_bounds = array<i64: 1>, scalar_prefetch = 0 : i64, scratch_operands = 0 : i64, tpu.core_type = #tpu.core_type<tc>, window_params = [{transform_indices = @transform_0, window_bounds = array<i64: 1, 2048>}, {transform_indices = @transform_1, window_bounds = array<i64: 1, 2048>}]} {
    %c0 = arith.constant 0 : index
    %c0_0 = arith.constant 0 : index
    %0 = vector.load %arg1[%c0, %c0_0] : memref<1x2048xf32, #tpu.memory_space<vmem>>, vector<1x2048xf32>
    %c0_1 = arith.constant 0 : index
    %c0_2 = arith.constant 0 : index
    %1 = vector.load %arg2[%c0_1, %c0_2] : memref<1x2048xf32, #tpu.memory_space<vmem>>, vector<1x2048xf32>
    tpu.vector_store %arg2[%c0_1, %c0_2], %0 {strides = array<i32>} : memref<1x2048xf32, #tpu.memory_space<vmem>>, vector<1x2048xf32>,
    return
  }
  func.func @transform_0(%arg0: i32) -> (i32, i32) {
    %c0_i32 = arith.constant 0 : i32
    %c0_i32_0 = arith.constant 0 : i32
    return %arg0, %c0_i32 : i32, i32
  }
  func.func @transform_1(%arg0: i32) -> (i32, i32) {
    %c0_i32 = arith.constant 0 : i32
    %c0_i32_0 = arith.constant 0 : i32
    return %arg0, %c0_i32 : i32, i32
  }
}

</mosaic_0001>

<llo_original>
// kernel: _identity_impl.1
$region0: #{_identity_impl.1}
  #allocation0 [shape = 'u32[]', space=smem, size = 0x4, offset = 0x4, fixed_abs, tag = 'smem constant byte address 0x4 - core index']
  #allocation1 [shape = 'u32[72,128]{1,0:T(1,128)}', space=vmem, size = 0x9000, scoped, tag = 'internal scratch']
  %s0 = inlined_call_operand.vmem [shape: f32[1,2048], index: 0, kind: input, shape index: {}, may-alias: {0,1}]
  %s1 = inlined_call_operand.vmem [shape: f32[1,2048], index: 1, kind: output, shape index: {}, may-alias: {0,1}]
  %s2 = sld [smem:[#allocation0]]
  $region14: #{_identity_impl.1} parent=0
    _
  %s4 = ssub.s32 1, %s2
  %s5 = scalar_select 0, %s4, %s2
  // Predicated region
  $region2: #{_identity_impl.1} parent=0 // pred_check
    _
  $region3: #{_identity_impl.1} parent=0 // pred_check_branch
    %7 = sbr.rel (0) target = $region5
  $region4: #{_identity_impl.1} parent=0 // pred_region
    _
  $region5: #{_identity_impl.1} parent=0 // pred_fallthru
    _
  %v8 = vld [vmem:[%s0] sm:$0xff]
  %v9 = vld [vmem:[%s0 + $0x8] sm:$0xff]
  %10 = vst [vmem:[%s1] sm:$0xff] %v8
  %11 = vst [vmem:[%s1 + $0x8] sm:$0xff] %v9
  // Predicated region
  $region6: #{_identity_impl.1} parent=0 // pred_check
    _
  $region7: #{_identity_impl.1} parent=0 // pred_check_branch
    %13 = sbr.rel (0) target = $region9
  $region8: #{_identity_impl.1} parent=0 // pred_region
    _
  $region9: #{_identity_impl.1} parent=0 // pred_fallthru
    _
  // Predicated region
  $region10: #{_identity_impl.1} parent=0 // pred_check
    _
  $region11: #{_identity_impl.1} parent=0 // pred_check_branch
    %15 = sbr.rel (0) target = $region13
  $region12: #{_identity_impl.1} parent=0 // pred_region
    _
  $region13: #{_identity_impl.1} parent=0 // pred_fallthru
    _

</llo_original>
